<compile_context>
chip_gen: v5e
topology: v5e:2x2
jax: 0.10.0
libtpu: 0.0.40
codegen_flags: <defaults>
</compile_context>

<pallas_src>
import functools
import numpy as np
import jax
import jax.numpy as jnp
from jax.experimental import pallas as pl
from jax.experimental.pallas import tpu as pltpu


def _encoder_kernel(x_ref, m_ref, w_ref, scale_ref, shift_ref,
                    img_out_ref, mask_out_ref, *, K, DM, Th, WoC, C):
    # x_ref, m_ref : (2, 2, Th + halo, Ws*C)  space-to-depth planes (img / bf16 mask)
    # w_ref        : (K, K, DM, Wo*C)         depthwise weights, pre-tiled along Wo
    # scale_ref    : (DM, Wo*C)               folded BN scale
    # shift_ref    : (DM, Wo*C)               folded BN shift (conv bias absorbed)
    # img_out_ref  : (DM, Th, Wo*C)
    # mask_out_ref : (Th, Wo*C)
    x = x_ref[...]
    m = m_ref[...]
    w = w_ref[...]
    scale = scale_ref[...][:, None, :]
    shift = shift_ref[...][:, None, :]

    # One pass over the K*K taps: each tap slice feeds both the mask window-sum
    # and the (DM, Th, WoC) partial-conv accumulator (single broadcast multiply).
    msum = jnp.zeros((Th, WoC), jnp.float32)
    acc = jnp.zeros((DM, Th, WoC), jnp.float32)
    for kh in range(K):
        ph, r0 = kh % 2, kh // 2
        for kw in range(K):
            pw, c0 = kw % 2, (kw // 2) * C
            m_s = m[ph, pw, r0:r0 + Th, c0:c0 + WoC].astype(jnp.float32)
            x_s = x[ph, pw, r0:r0 + Th, c0:c0 + WoC].astype(jnp.float32)
            msum = msum + m_s
            acc = acc + (x_s * m_s)[None, :, :] * w[kh, kw][:, None, :]

    # ---- partial-conv ratio, fused bias+BN affine, ReLU ----
    mask_clip = jnp.clip(msum, 0.0, 1.0)
    ratio = (float(K * K) / (msum + 1e-8)) * mask_clip
    out = acc * ratio[None, :, :] * scale + shift
    img_out_ref[...] = jnp.maximum(out, 0.0)      # single lane-dense store
    mask_out_ref[...] = mask_clip                 # written once (no DM replication)


def encoder_layer(img_nchw, mask_nchw, weight, bias, bn_gamma, bn_beta,
                  bn_mean, bn_var, *, kernel_size, depth_multiplier, stride=2,
                  bn_eps=1e-5, tile_h=None, img_dtype=jnp.float32):
    assert stride == 2, "space-to-depth path is specialized to stride 2"
    N, C, H, W = img_nchw.shape
    K, DM = kernel_size, depth_multiplier
    pad = K // 2
    halo = (K - 1) // 2
    Ho = (H + 2 * pad - K) // stride + 1
    Wo = (W + 2 * pad - K) // stride + 1
    WoC = Wo * C

    Hs0 = (H + 2 * pad + 1) // 2
    Ws0 = (W + 2 * pad + 1) // 2
    Ws_need = max(Wo + halo, Ws0)
    WsC = Ws_need * C

    # Row-tile size: big enough to amortize per-grid-step overhead (~0.35 us),
    # small enough that double-buffered blocks + live f32 temporaries stay well
    # inside v7x's 64 MiB physical VMEM (and the default scoped limits).
    if tile_h is None:
        itemsize = np.dtype(img_dtype).itemsize
        img_row_bytes = 4 * WsC * itemsize          # 4 s2d planes per output row
        mask_row_bytes = 4 * WsC * 2                # bf16 mask planes
        out_row_bytes = (DM + 1) * WoC * 4          # img_out + mask_out (f32)
        acc_row_bytes = (DM + 1) * WoC * 4          # live accumulators
        per_row = 2 * (img_row_bytes + mask_row_bytes + out_row_bytes) + acc_row_bytes
        tile_h = max(8, (12 << 20) // max(int(per_row), 1))
    tile_h = max(1, min(int(tile_h), Ho))
    if tile_h < Ho:
        tile_h = max(8, (tile_h // 8) * 8)    # keep output sublane dim 8-aligned
        tile_h = min(tile_h, Ho)
    nT = pl.cdiv(Ho, tile_h)
    Ho_pad = nT * tile_h
    Hs_need = max(Ho_pad + halo, Hs0)
    R = tile_h + halo

    # NOTE: img could also be DMA'd as bf16 on bandwidth-starved v5e if the
    # consumer tolerates it (img_dtype=jnp.bfloat16); default keeps fp32 numerics.
    img = jnp.transpose(img_nchw, (0, 2, 3, 1)).astype(img_dtype)
    # Mask is exactly 0/1 -> bf16 DMA is lossless and halves its HBM bytes.
    mask = jnp.transpose(mask_nchw, (0, 2, 3, 1)).astype(jnp.bfloat16)

    def pad_s2d(x):
        x = jnp.pad(x, ((0, 0), (pad, pad), (pad, pad), (0, 0)))
        Hp, Wp = x.shape[1], x.shape[2]
        x = jnp.pad(x, ((0, 0), (0, Hp % 2), (0, Wp % 2), (0, 0)))  # even spatial dims
        Hp, Wp = x.shape[1], x.shape[2]
        x = x.reshape(N, Hp // 2, 2, Wp // 2, 2, C)
        x = jnp.transpose(x, (0, 2, 4, 1, 3, 5))        # (N, 2, 2, Hs, Ws, C)
        Hs, Ws = Hp // 2, Wp // 2
        x = jnp.pad(x, ((0, 0), (0, 0), (0, 0),
                        (0, Hs_need - Hs), (0, Ws_need - Ws), (0, 0)))
        return x.reshape(N, 2, 2, Hs_need, WsC)          # lane-dense last dim

    def make_row_tiles(x):   # (N, 2, 2, Hs_need, WsC) -> (N, nT, 2, 2, R, WsC)
        if nT == 1:
            return x[:, None, :, :, :R, :]
        slabs = [x[:, :, :, t * tile_h: t * tile_h + R, :] for t in range(nT)]
        return jnp.stack(slabs, axis=1)

    x_t = make_row_tiles(pad_s2d(img))
    m_t = make_row_tiles(pad_s2d(mask))

    # weight comes in as (K, K, C, DM); pre-tile along Wo so the lane axis is full.
    w1 = jnp.transpose(weight, (0, 1, 3, 2)).astype(jnp.float32)        # (K, K, DM, C)
    w_t = jnp.tile(w1[:, :, :, None, :], (1, 1, 1, Wo, 1)).reshape(K, K, DM, WoC)

    scale = (bn_gamma / jnp.sqrt(bn_var + bn_eps)).astype(jnp.float32)
    shift = (bias * scale + bn_beta - bn_mean * scale).astype(jnp.float32)  # bias folded

    def to_dm_woc(v):   # (C*DM,), channel index c*DM+m -> (DM, Wo*C) with lane w*C+c
        v = jnp.transpose(v.reshape(C, DM), (1, 0))
        return jnp.tile(v[:, None, :], (1, Wo, 1)).reshape(DM, WoC)

    scale_t = to_dm_woc(scale)
    shift_t = to_dm_woc(shift)

    kern = functools.partial(_encoder_kernel, K=K, DM=DM, Th=tile_h, WoC=WoC, C=C)

    img_out, mask_out = pl.pallas_call(
        kern,
        grid=(N, nT),
        in_specs=[
            pl.BlockSpec((None, None, 2, 2, R, WsC), lambda n, t: (n, t, 0, 0, 0, 0)),
            pl.BlockSpec((None, None, 2, 2, R, WsC), lambda n, t: (n, t, 0, 0, 0, 0)),
            pl.BlockSpec((K, K, DM, WoC), lambda n, t: (0, 0, 0, 0)),
            pl.BlockSpec((DM, WoC), lambda n, t: (0, 0)),
            pl.BlockSpec((DM, WoC), lambda n, t: (0, 0)),
        ],
        out_specs=[
            pl.BlockSpec((None, DM, tile_h, WoC), lambda n, t: (n, 0, t, 0)),
            pl.BlockSpec((None, tile_h, WoC), lambda n, t: (n, t, 0)),
        ],
        out_shape=[
            jax.ShapeDtypeStruct((N, DM, Ho_pad, WoC), jnp.float32),
            jax.ShapeDtypeStruct((N, Ho_pad, WoC), jnp.float32),
        ],
        compiler_params=pltpu.CompilerParams(
            dimension_semantics=("parallel", "parallel"),
            vmem_limit_bytes=64 * 1024 * 1024,
        ),
    )(x_t, m_t, w_t, scale_t, shift_t)

    # (N, DM, Ho_pad, Wo*C) -> NCHW with output channel index c*DM + m (groups order)
    img_out = img_out[:, :, :Ho, :].reshape(N, DM, Ho, Wo, C)
    img_out = jnp.transpose(img_out, (0, 4, 1, 2, 3)).reshape(N, C * DM, Ho, Wo)

    mclip = mask_out[:, :Ho, :].reshape(N, Ho, Wo, C)
    mclip = jnp.transpose(mclip, (0, 3, 1, 2))                    # (N, C, Ho, Wo)
    mask_rep = jnp.broadcast_to(mclip[:, :, None, :, :], (N, C, DM, Ho, Wo))
    mask_rep = mask_rep.reshape(N, C * DM, Ho, Wo)

    return img_out, mask_rep


def reference(img_nchw, mask_nchw, weight, bias, gamma, beta, mean, var,
              kernel_size, depth_multiplier, stride=2, eps=1e-5):
    """Pure-JAX reference (same semantics) for validation."""
    N, C, H, W = img_nchw.shape
    K, DM = kernel_size, depth_multiplier
    pad = K // 2
    img = jnp.transpose(img_nchw, (0, 2, 3, 1))
    mask = jnp.transpose(mask_nchw, (0, 2, 3, 1))
    w_hwio = weight.reshape(K, K, 1, C * DM)  # group-ordered: out chan c*DM+m
    dn = ("NHWC", "HWIO", "NHWC")

    def conv(x, w):
        return jax.lax.conv_general_dilated(
            x, w, window_strides=(stride, stride),
            padding=((pad, pad), (pad, pad)),
            dimension_numbers=dn, feature_group_count=C)

    img_out = conv(img * mask, w_hwio)
    msum = conv(mask, jnp.ones_like(w_hwio))
    ratio = (K * K) / (msum + 1e-8)
    mclip = jnp.clip(msum, 0.0, 1.0)
    img_out = img_out * ratio * mclip + bias
    scale = gamma / jnp.sqrt(var + eps)
    img_out = img_out * scale + (beta - mean * scale)
    img_out = jnp.maximum(img_out, 0.0)
    return (jnp.transpose(img_out, (0, 3, 1, 2)),
            jnp.transpose(mclip, (0, 3, 1, 2)))


def _run_case(key, N, C, H, W, K, DM, tile_h=None):
    k1, k2, k3, k4, k5, k6, k7, k8 = jax.random.split(key, 8)
    img = jax.random.normal(k1, (N, C, H, W), jnp.float32)
    mask = (jax.random.uniform(k2, (N, C, H, W)) > 0.4).astype(jnp.float32)
    weight = 0.3 * jax.random.normal(k3, (K, K, C, DM), jnp.float32)
    bias = 0.1 * jax.random.normal(k4, (C * DM,), jnp.float32)
    gamma = 1.0 + 0.1 * jax.random.normal(k5, (C * DM,), jnp.float32)
    beta = 0.1 * jax.random.normal(k6, (C * DM,), jnp.float32)
    mean = 0.1 * jax.random.normal(k7, (C * DM,), jnp.float32)
    var = 0.5 + 0.1 * jnp.abs(jax.random.normal(k8, (C * DM,), jnp.float32))

    img_out, mask_out = encoder_layer(img, mask, weight, bias, gamma, beta,
                                      mean, var, kernel_size=K,
                                      depth_multiplier=DM, stride=2,
                                      tile_h=tile_h)
    jax.block_until_ready((img_out, mask_out))

    ref_img, ref_mask = reference(img, mask, weight, bias, gamma, beta,
                                  mean, var, K, DM, stride=2)
    Ho, Wo = (H + 2 * (K // 2) - K) // 2 + 1, (W + 2 * (K // 2) - K) // 2 + 1
    assert img_out.shape == (N, C * DM, Ho, Wo)
    assert mask_out.shape == (N, C * DM, Ho, Wo)
    assert np.allclose(np.asarray(img_out), np.asarray(ref_img), rtol=1e-4, atol=1e-4)
    assert np.allclose(np.asarray(mask_out), np.asarray(ref_mask), atol=1e-5)


if __name__ == "__main__":
    key = jax.random.PRNGKey(0)
    k_a, k_b = jax.random.split(key, 2)

    # Main small config (single row tile).
    _run_case(k_a, N=2, C=4, H=16, W=16, K=3, DM=2)
    # Exercise the multi-row-tile (halo + padded tail) path.
    _run_case(k_b, N=1, C=4, H=40, W=40, K=3, DM=2, tile_h=8)

    print("KERNEL_OK")
</pallas_src>

<mosaic_0001>
module attributes {stable_mosaic.version = 11 : i64} {
  func.func @_encoder_kernel(%arg0: i32, %arg1: i32, %arg2: memref<1x1x2x2x9x36xf32, #tpu.memory_space<vmem>>, %arg3: memref<1x1x2x2x9x36xbf16, #tpu.memory_space<vmem>>, %arg4: memref<3x3x2x32xf32, #tpu.memory_space<vmem>>, %arg5: memref<2x32xf32, #tpu.memory_space<vmem>>, %arg6: memref<2x32xf32, #tpu.memory_space<vmem>>, %arg7: memref<1x2x8x32xf32, #tpu.memory_space<vmem>>, %arg8: memref<1x8x32xf32, #tpu.memory_space<vmem>>) attributes {dimension_semantics = [#tpu.dimension_semantics<parallel>, #tpu.dimension_semantics<parallel>], iteration_bounds = array<i64: 2, 1>, scalar_prefetch = 0 : i64, scratch_operands = 0 : i64, tpu.core_type = #tpu.core_type<tc>, window_params = [{transform_indices = @transform_0, window_bounds = array<i64: 1, 1, 2, 2, 9, 36>}, {transform_indices = @transform_1, window_bounds = array<i64: 1, 1, 2, 2, 9, 36>}, {pipeline_mode = #tpu.pipeline_mode<synchronous>, transform_indices = @transform_2, window_bounds = array<i64: 3, 3, 2, 32>}, {pipeline_mode = #tpu.pipeline_mode<synchronous>, transform_indices = @transform_3, window_bounds = array<i64: 2, 32>}, {pipeline_mode = #tpu.pipeline_mode<synchronous>, transform_indices = @transform_4, window_bounds = array<i64: 2, 32>}, {transform_indices = @transform_5, window_bounds = array<i64: 1, 2, 8, 32>}, {transform_indices = @transform_6, window_bounds = array<i64: 1, 8, 32>}]} {
    %c0 = arith.constant 0 : index
    %c0_0 = arith.constant 0 : index
    %c0_1 = arith.constant 0 : index
    %c0_2 = arith.constant 0 : index
    %c0_3 = arith.constant 0 : index
    %c0_4 = arith.constant 0 : index
    %0 = vector.load %arg2[%c0, %c0_0, %c0_1, %c0_2, %c0_3, %c0_4] : memref<1x1x2x2x9x36xf32, #tpu.memory_space<vmem>>, vector<1x1x2x2x9x36xf32>
    %1 = vector.shape_cast %0 : vector<1x1x2x2x9x36xf32> to vector<2x2x9x36xf32>
    %c0_5 = arith.constant 0 : index
    %c0_6 = arith.constant 0 : index
    %c0_7 = arith.constant 0 : index
    %c0_8 = arith.constant 0 : index
    %c0_9 = arith.constant 0 : index
    %c0_10 = arith.constant 0 : index
    %2 = vector.load %arg3[%c0_5, %c0_6, %c0_7, %c0_8, %c0_9, %c0_10] : memref<1x1x2x2x9x36xbf16, #tpu.memory_space<vmem>>, vector<1x1x2x2x9x36xbf16>
    %3 = vector.shape_cast %2 : vector<1x1x2x2x9x36xbf16> to vector<2x2x9x36xbf16>
    %c0_11 = arith.constant 0 : index
    %c0_12 = arith.constant 0 : index
    %c0_13 = arith.constant 0 : index
    %c0_14 = arith.constant 0 : index
    %4 = vector.load %arg4[%c0_11, %c0_12, %c0_13, %c0_14] : memref<3x3x2x32xf32, #tpu.memory_space<vmem>>, vector<3x3x2x32xf32>
    %c0_15 = arith.constant 0 : index
    %c0_16 = arith.constant 0 : index
    %5 = vector.load %arg5[%c0_15, %c0_16] : memref<2x32xf32, #tpu.memory_space<vmem>>, vector<2x32xf32>
    %6 = vector.shape_cast %5 : vector<2x32xf32> to vector<2x1x32xf32>
    %c0_17 = arith.constant 0 : index
    %c0_18 = arith.constant 0 : index
    %7 = vector.load %arg6[%c0_17, %c0_18] : memref<2x32xf32, #tpu.memory_space<vmem>>, vector<2x32xf32>
    %8 = vector.shape_cast %7 : vector<2x32xf32> to vector<2x1x32xf32>
    %cst = arith.constant 0.000000e+00 : f32
    %9 = vector.broadcast %cst : f32 to vector<8x32xf32>
    %cst_19 = arith.constant 0.000000e+00 : f32
    %10 = vector.broadcast %cst_19 : f32 to vector<2x8x32xf32>
    %11 = vector.extract_strided_slice %3 {offsets = [0, 0, 0, 0], sizes = [1, 1, 8, 32], strides = [1, 1, 1, 1]} : vector<2x2x9x36xbf16> to vector<1x1x8x32xbf16>
    %12 = vector.shape_cast %11 : vector<1x1x8x32xbf16> to vector<8x32xbf16>
    %13 = arith.extf %12 : vector<8x32xbf16> to vector<8x32xf32>
    %14 = vector.extract_strided_slice %1 {offsets = [0, 0, 0, 0], sizes = [1, 1, 8, 32], strides = [1, 1, 1, 1]} : vector<2x2x9x36xf32> to vector<1x1x8x32xf32>
    %15 = vector.shape_cast %14 : vector<1x1x8x32xf32> to vector<8x32xf32>
    %16 = arith.addf %9, %13 : vector<8x32xf32>
    %17 = arith.mulf %15, %13 : vector<8x32xf32>
    %18 = vector.shape_cast %17 : vector<8x32xf32> to vector<1x8x32xf32>
    %19 = vector.extract_strided_slice %4 {offsets = [0, 0, 0, 0], sizes = [1, 1, 2, 32], strides = [1, 1, 1, 1]} : vector<3x3x2x32xf32> to vector<1x1x2x32xf32>
    %20 = vector.shape_cast %19 : vector<1x1x2x32xf32> to vector<2x32xf32>
    %21 = vector.shape_cast %20 : vector<2x32xf32> to vector<2x1x32xf32>
    %22 = vector.broadcast %18 : vector<1x8x32xf32> to vector<2x8x32xf32>
    %23 = vector.broadcast %21 : vector<2x1x32xf32> to vector<2x8x32xf32>
    %24 = arith.mulf %22, %23 : vector<2x8x32xf32>
    %25 = arith.addf %10, %24 : vector<2x8x32xf32>
    %26 = vector.extract_strided_slice %3 {offsets = [0, 1, 0, 0], sizes = [1, 1, 8, 32], strides = [1, 1, 1, 1]} : vector<2x2x9x36xbf16> to vector<1x1x8x32xbf16>
    %27 = vector.shape_cast %26 : vector<1x1x8x32xbf16> to vector<8x32xbf16>
    %28 = arith.extf %27 : vector<8x32xbf16> to vector<8x32xf32>
    %29 = vector.extract_strided_slice %1 {offsets = [0, 1, 0, 0], sizes = [1, 1, 8, 32], strides = [1, 1, 1, 1]} : vector<2x2x9x36xf32> to vector<1x1x8x32xf32>
    %30 = vector.shape_cast %29 : vector<1x1x8x32xf32> to vector<8x32xf32>
    %31 = arith.addf %16, %28 : vector<8x32xf32>
    %32 = arith.mulf %30, %28 : vector<8x32xf32>
    %33 = vector.shape_cast %32 : vector<8x32xf32> to vector<1x8x32xf32>
    %34 = vector.extract_strided_slice %4 {offsets = [0, 1, 0, 0], sizes = [1, 1, 2, 32], strides = [1, 1, 1, 1]} : vector<3x3x2x32xf32> to vector<1x1x2x32xf32>
    %35 = vector.shape_cast %34 : vector<1x1x2x32xf32> to vector<2x32xf32>
    %36 = vector.shape_cast %35 : vector<2x32xf32> to vector<2x1x32xf32>
    %37 = vector.broadcast %33 : vector<1x8x32xf32> to vector<2x8x32xf32>
    %38 = vector.broadcast %36 : vector<2x1x32xf32> to vector<2x8x32xf32>
    %39 = arith.mulf %37, %38 : vector<2x8x32xf32>
    %40 = arith.addf %25, %39 : vector<2x8x32xf32>
    %41 = vector.extract_strided_slice %3 {offsets = [0, 0, 0, 4], sizes = [1, 1, 8, 32], strides = [1, 1, 1, 1]} : vector<2x2x9x36xbf16> to vector<1x1x8x32xbf16>
    %42 = vector.shape_cast %41 : vector<1x1x8x32xbf16> to vector<8x32xbf16>
    %43 = arith.extf %42 : vector<8x32xbf16> to vector<8x32xf32>
    %44 = vector.extract_strided_slice %1 {offsets = [0, 0, 0, 4], sizes = [1, 1, 8, 32], strides = [1, 1, 1, 1]} : vector<2x2x9x36xf32> to vector<1x1x8x32xf32>
    %45 = vector.shape_cast %44 : vector<1x1x8x32xf32> to vector<8x32xf32>
    %46 = arith.addf %31, %43 : vector<8x32xf32>
    %47 = arith.mulf %45, %43 : vector<8x32xf32>
    %48 = vector.shape_cast %47 : vector<8x32xf32> to vector<1x8x32xf32>
    %49 = vector.extract_strided_slice %4 {offsets = [0, 2, 0, 0], sizes = [1, 1, 2, 32], strides = [1, 1, 1, 1]} : vector<3x3x2x32xf32> to vector<1x1x2x32xf32>
    %50 = vector.shape_cast %49 : vector<1x1x2x32xf32> to vector<2x32xf32>
    %51 = vector.shape_cast %50 : vector<2x32xf32> to vector<2x1x32xf32>
    %52 = vector.broadcast %48 : vector<1x8x32xf32> to vector<2x8x32xf32>
    %53 = vector.broadcast %51 : vector<2x1x32xf32> to vector<2x8x32xf32>
    %54 = arith.mulf %52, %53 : vector<2x8x32xf32>
    %55 = arith.addf %40, %54 : vector<2x8x32xf32>
    %56 = vector.extract_strided_slice %3 {offsets = [1, 0, 0, 0], sizes = [1, 1, 8, 32], strides = [1, 1, 1, 1]} : vector<2x2x9x36xbf16> to vector<1x1x8x32xbf16>
    %57 = vector.shape_cast %56 : vector<1x1x8x32xbf16> to vector<8x32xbf16>
    %58 = arith.extf %57 : vector<8x32xbf16> to vector<8x32xf32>
    %59 = vector.extract_strided_slice %1 {offsets = [1, 0, 0, 0], sizes = [1, 1, 8, 32], strides = [1, 1, 1, 1]} : vector<2x2x9x36xf32> to vector<1x1x8x32xf32>
    %60 = vector.shape_cast %59 : vector<1x1x8x32xf32> to vector<8x32xf32>
    %61 = arith.addf %46, %58 : vector<8x32xf32>
    %62 = arith.mulf %60, %58 : vector<8x32xf32>
    %63 = vector.shape_cast %62 : vector<8x32xf32> to vector<1x8x32xf32>
    %64 = vector.extract_strided_slice %4 {offsets = [1, 0, 0, 0], sizes = [1, 1, 2, 32], strides = [1, 1, 1, 1]} : vector<3x3x2x32xf32> to vector<1x1x2x32xf32>
    %65 = vector.shape_cast %64 : vector<1x1x2x32xf32> to vector<2x32xf32>
    %66 = vector.shape_cast %65 : vector<2x32xf32> to vector<2x1x32xf32>
    %67 = vector.broadcast %63 : vector<1x8x32xf32> to vector<2x8x32xf32>
    %68 = vector.broadcast %66 : vector<2x1x32xf32> to vector<2x8x32xf32>
    %69 = arith.mulf %67, %68 : vector<2x8x32xf32>
    %70 = arith.addf %55, %69 : vector<2x8x32xf32>
    %71 = vector.extract_strided_slice %3 {offsets = [1, 1, 0, 0], sizes = [1, 1, 8, 32], strides = [1, 1, 1, 1]} : vector<2x2x9x36xbf16> to vector<1x1x8x32xbf16>
    %72 = vector.shape_cast %71 : vector<1x1x8x32xbf16> to vector<8x32xbf16>
    %73 = arith.extf %72 : vector<8x32xbf16> to vector<8x32xf32>
    %74 = vector.extract_strided_slice %1 {offsets = [1, 1, 0, 0], sizes = [1, 1, 8, 32], strides = [1, 1, 1, 1]} : vector<2x2x9x36xf32> to vector<1x1x8x32xf32>
    %75 = vector.shape_cast %74 : vector<1x1x8x32xf32> to vector<8x32xf32>
    %76 = arith.addf %61, %73 : vector<8x32xf32>
    %77 = arith.mulf %75, %73 : vector<8x32xf32>
    %78 = vector.shape_cast %77 : vector<8x32xf32> to vector<1x8x32xf32>
    %79 = vector.extract_strided_slice %4 {offsets = [1, 1, 0, 0], sizes = [1, 1, 2, 32], strides = [1, 1, 1, 1]} : vector<3x3x2x32xf32> to vector<1x1x2x32xf32>
    %80 = vector.shape_cast %79 : vector<1x1x2x32xf32> to vector<2x32xf32>
    %81 = vector.shape_cast %80 : vector<2x32xf32> to vector<2x1x32xf32>
    %82 = vector.broadcast %78 : vector<1x8x32xf32> to vector<2x8x32xf32>
    %83 = vector.broadcast %81 : vector<2x1x32xf32> to vector<2x8x32xf32>
    %84 = arith.mulf %82, %83 : vector<2x8x32xf32>
    %85 = arith.addf %70, %84 : vector<2x8x32xf32>
    %86 = vector.extract_strided_slice %3 {offsets = [1, 0, 0, 4], sizes = [1, 1, 8, 32], strides = [1, 1, 1, 1]} : vector<2x2x9x36xbf16> to vector<1x1x8x32xbf16>
    %87 = vector.shape_cast %86 : vector<1x1x8x32xbf16> to vector<8x32xbf16>
    %88 = arith.extf %87 : vector<8x32xbf16> to vector<8x32xf32>
    %89 = vector.extract_strided_slice %1 {offsets = [1, 0, 0, 4], sizes = [1, 1, 8, 32], strides = [1, 1, 1, 1]} : vector<2x2x9x36xf32> to vector<1x1x8x32xf32>
    %90 = vector.shape_cast %89 : vector<1x1x8x32xf32> to vector<8x32xf32>
    %91 = arith.addf %76, %88 : vector<8x32xf32>
    %92 = arith.mulf %90, %88 : vector<8x32xf32>
    %93 = vector.shape_cast %92 : vector<8x32xf32> to vector<1x8x32xf32>
    %94 = vector.extract_strided_slice %4 {offsets = [1, 2, 0, 0], sizes = [1, 1, 2, 32], strides = [1, 1, 1, 1]} : vector<3x3x2x32xf32> to vector<1x1x2x32xf32>
    %95 = vector.shape_cast %94 : vector<1x1x2x32xf32> to vector<2x32xf32>
    %96 = vector.shape_cast %95 : vector<2x32xf32> to vector<2x1x32xf32>
    %97 = vector.broadcast %93 : vector<1x8x32xf32> to vector<2x8x32xf32>
    %98 = vector.broadcast %96 : vector<2x1x32xf32> to vector<2x8x32xf32>
    %99 = arith.mulf %97, %98 : vector<2x8x32xf32>
    %100 = arith.addf %85, %99 : vector<2x8x32xf32>
    %101 = vector.extract_strided_slice %3 {offsets = [0, 0, 1, 0], sizes = [1, 1, 8, 32], strides = [1, 1, 1, 1]} : vector<2x2x9x36xbf16> to vector<1x1x8x32xbf16>
    %102 = vector.shape_cast %101 : vector<1x1x8x32xbf16> to vector<8x32xbf16>
    %103 = arith.extf %102 : vector<8x32xbf16> to vector<8x32xf32>
    %104 = vector.extract_strided_slice %1 {offsets = [0, 0, 1, 0], sizes = [1, 1, 8, 32], strides = [1, 1, 1, 1]} : vector<2x2x9x36xf32> to vector<1x1x8x32xf32>
    %105 = vector.shape_cast %104 : vector<1x1x8x32xf32> to vector<8x32xf32>
    %106 = arith.addf %91, %103 : vector<8x32xf32>
    %107 = arith.mulf %105, %103 : vector<8x32xf32>
    %108 = vector.shape_cast %107 : vector<8x32xf32> to vector<1x8x32xf32>
    %109 = vector.extract_strided_slice %4 {offsets = [2, 0, 0, 0], sizes = [1, 1, 2, 32], strides = [1, 1, 1, 1]} : vector<3x3x2x32xf32> to vector<1x1x2x32xf32>
    %110 = vector.shape_cast %109 : vector<1x1x2x32xf32> to vector<2x32xf32>
    %111 = vector.shape_cast %110 : vector<2x32xf32> to vector<2x1x32xf32>
    %112 = vector.broadcast %108 : vector<1x8x32xf32> to vector<2x8x32xf32>
    %113 = vector.broadcast %111 : vector<2x1x32xf32> to vector<2x8x32xf32>
    %114 = arith.mulf %112, %113 : vector<2x8x32xf32>
    %115 = arith.addf %100, %114 : vector<2x8x32xf32>
    %116 = vector.extract_strided_slice %3 {offsets = [0, 1, 1, 0], sizes = [1, 1, 8, 32], strides = [1, 1, 1, 1]} : vector<2x2x9x36xbf16> to vector<1x1x8x32xbf16>
    %117 = vector.shape_cast %116 : vector<1x1x8x32xbf16> to vector<8x32xbf16>
    %118 = arith.extf %117 : vector<8x32xbf16> to vector<8x32xf32>
    %119 = vector.extract_strided_slice %1 {offsets = [0, 1, 1, 0], sizes = [1, 1, 8, 32], strides = [1, 1, 1, 1]} : vector<2x2x9x36xf32> to vector<1x1x8x32xf32>
    %120 = vector.shape_cast %119 : vector<1x1x8x32xf32> to vector<8x32xf32>
    %121 = arith.addf %106, %118 : vector<8x32xf32>
    %122 = arith.mulf %120, %118 : vector<8x32xf32>
    %123 = vector.shape_cast %122 : vector<8x32xf32> to vector<1x8x32xf32>
    %124 = vector.extract_strided_slice %4 {offsets = [2, 1, 0, 0], sizes = [1, 1, 2, 32], strides = [1, 1, 1, 1]} : vector<3x3x2x32xf32> to vector<1x1x2x32xf32>
    %125 = vector.shape_cast %124 : vector<1x1x2x32xf32> to vector<2x32xf32>
    %126 = vector.shape_cast %125 : vector<2x32xf32> to vector<2x1x32xf32>
    %127 = vector.broadcast %123 : vector<1x8x32xf32> to vector<2x8x32xf32>
    %128 = vector.broadcast %126 : vector<2x1x32xf32> to vector<2x8x32xf32>
    %129 = arith.mulf %127, %128 : vector<2x8x32xf32>
    %130 = arith.addf %115, %129 : vector<2x8x32xf32>
    %131 = vector.extract_strided_slice %3 {offsets = [0, 0, 1, 4], sizes = [1, 1, 8, 32], strides = [1, 1, 1, 1]} : vector<2x2x9x36xbf16> to vector<1x1x8x32xbf16>
    %132 = vector.shape_cast %131 : vector<1x1x8x32xbf16> to vector<8x32xbf16>
    %133 = arith.extf %132 : vector<8x32xbf16> to vector<8x32xf32>
    %134 = vector.extract_strided_slice %1 {offsets = [0, 0, 1, 4], sizes = [1, 1, 8, 32], strides = [1, 1, 1, 1]} : vector<2x2x9x36xf32> to vector<1x1x8x32xf32>
    %135 = vector.shape_cast %134 : vector<1x1x8x32xf32> to vector<8x32xf32>
    %136 = arith.addf %121, %133 : vector<8x32xf32>
    %137 = arith.mulf %135, %133 : vector<8x32xf32>
    %138 = vector.shape_cast %137 : vector<8x32xf32> to vector<1x8x32xf32>
    %139 = vector.extract_strided_slice %4 {offsets = [2, 2, 0, 0], sizes = [1, 1, 2, 32], strides = [1, 1, 1, 1]} : vector<3x3x2x32xf32> to vector<1x1x2x32xf32>
    %140 = vector.shape_cast %139 : vector<1x1x2x32xf32> to vector<2x32xf32>
    %141 = vector.shape_cast %140 : vector<2x32xf32> to vector<2x1x32xf32>
    %142 = vector.broadcast %138 : vector<1x8x32xf32> to vector<2x8x32xf32>
    %143 = vector.broadcast %141 : vector<2x1x32xf32> to vector<2x8x32xf32>
    %144 = arith.mulf %142, %143 : vector<2x8x32xf32>
    %145 = arith.addf %130, %144 : vector<2x8x32xf32>
    %cst_20 = arith.constant 0.000000e+00 : f32
    %cst_21 = arith.constant 1.000000e+00 : f32
    %146 = vector.broadcast %cst_20 : f32 to vector<8x32xf32>
    %147 = arith.maximumf %146, %136 : vector<8x32xf32>
    %148 = vector.broadcast %cst_21 : f32 to vector<8x32xf32>
    %149 = arith.minimumf %148, %147 : vector<8x32xf32>
    %cst_22 = arith.constant 9.99999993E-9 : f32
    %150 = vector.broadcast %cst_22 : f32 to vector<8x32xf32>
    %151 = arith.addf %136, %150 : vector<8x32xf32>
    %cst_23 = arith.constant 9.000000e+00 : f32
    %152 = vector.broadcast %cst_23 : f32 to vector<8x32xf32>
    %153 = arith.divf %152, %151 : vector<8x32xf32>
    %154 = arith.mulf %153, %149 : vector<8x32xf32>
    %155 = vector.shape_cast %154 : vector<8x32xf32> to vector<1x8x32xf32>
    %156 = vector.broadcast %155 : vector<1x8x32xf32> to vector<2x8x32xf32>
    %157 = arith.mulf %145, %156 : vector<2x8x32xf32>
    %158 = vector.broadcast %6 : vector<2x1x32xf32> to vector<2x8x32xf32>
    %159 = arith.mulf %157, %158 : vector<2x8x32xf32>
    %160 = vector.broadcast %8 : vector<2x1x32xf32> to vector<2x8x32xf32>
    %161 = arith.addf %159, %160 : vector<2x8x32xf32>
    %cst_24 = arith.constant 0.000000e+00 : f32
    %162 = vector.broadcast %cst_24 : f32 to vector<2x8x32xf32>
    %163 = arith.maximumf %161, %162 : vector<2x8x32xf32>
    %c0_25 = arith.constant 0 : index
    %c0_26 = arith.constant 0 : index
    %c0_27 = arith.constant 0 : index
    %c0_28 = arith.constant 0 : index
    %164 = vector.load %arg7[%c0_25, %c0_26, %c0_27, %c0_28] : memref<1x2x8x32xf32, #tpu.memory_space<vmem>>, vector<1x2x8x32xf32>
    %165 = vector.shape_cast %164 : vector<1x2x8x32xf32> to vector<2x8x32xf32>
    %166 = vector.shape_cast %163 : vector<2x8x32xf32> to vector<1x2x8x32xf32>
    tpu.vector_store %arg7[%c0_25, %c0_26, %c0_27, %c0_28], %166 {strides = array<i32>} : memref<1x2x8x32xf32, #tpu.memory_space<vmem>>, vector<1x2x8x32xf32>,
    %c0_29 = arith.constant 0 : index
    %c0_30 = arith.constant 0 : index
    %c0_31 = arith.constant 0 : index
    %167 = vector.load %arg8[%c0_29, %c0_30, %c0_31] : memref<1x8x32xf32, #tpu.memory_space<vmem>>, vector<1x8x32xf32>
    %168 = vector.shape_cast %167 : vector<1x8x32xf32> to vector<8x32xf32>
    %169 = vector.shape_cast %149 : vector<8x32xf32> to vector<1x8x32xf32>
    tpu.vector_store %arg8[%c0_29, %c0_30, %c0_31], %169 {strides = array<i32>} : memref<1x8x32xf32, #tpu.memory_space<vmem>>, vector<1x8x32xf32>,
    return
  }
  func.func @transform_0(%arg0: i32, %arg1: i32) -> (i32, i32, i32, i32, i32, i32) {
    %c0_i32 = arith.constant 0 : i32
    %c0_i32_0 = arith.constant 0 : i32
    %c0_i32_1 = arith.constant 0 : i32
    %c0_i32_2 = arith.constant 0 : i32
    %c0_i32_3 = arith.constant 0 : i32
    return %arg0, %arg1, %c0_i32, %c0_i32_0, %c0_i32_1, %c0_i32_2 : i32, i32, i32, i32, i32, i32
  }
  func.func @transform_1(%arg0: i32, %arg1: i32) -> (i32, i32, i32, i32, i32, i32) {
    %c0_i32 = arith.constant 0 : i32
    %c0_i32_0 = arith.constant 0 : i32
    %c0_i32_1 = arith.constant 0 : i32
    %c0_i32_2 = arith.constant 0 : i32
    %c0_i32_3 = arith.constant 0 : i32
    return %arg0, %arg1, %c0_i32, %c0_i32_0, %c0_i32_1, %c0_i32_2 : i32, i32, i32, i32, i32, i32
  }
  func.func @transform_2(%arg0: i32, %arg1: i32) -> (i32, i32, i32, i32) {
    %c0_i32 = arith.constant 0 : i32
    %c0_i32_0 = arith.constant 0 : i32
    %c0_i32_1 = arith.constant 0 : i32
    %c0_i32_2 = arith.constant 0 : i32
    %c0_i32_3 = arith.constant 0 : i32
    return %c0_i32, %c0_i32_0, %c0_i32_1, %c0_i32_2 : i32, i32, i32, i32
  }
  func.func @transform_3(%arg0: i32, %arg1: i32) -> (i32, i32) {
    %c0_i32 = arith.constant 0 : i32
    %c0_i32_0 = arith.constant 0 : i32
    %c0_i32_1 = arith.constant 0 : i32
    return %c0_i32, %c0_i32_0 : i32, i32
  }
  func.func @transform_4(%arg0: i32, %arg1: i32) -> (i32, i32) {
    %c0_i32 = arith.constant 0 : i32
    %c0_i32_0 = arith.constant 0 : i32
    %c0_i32_1 = arith.constant 0 : i32
    return %c0_i32, %c0_i32_0 : i32, i32
  }
  func.func @transform_5(%arg0: i32, %arg1: i32) -> (i32, i32, i32, i32) {
    %c0_i32 = arith.constant 0 : i32
    %c0_i32_0 = arith.constant 0 : i32
    %c0_i32_1 = arith.constant 0 : i32
    return %arg0, %c0_i32, %arg1, %c0_i32_0 : i32, i32, i32, i32
  }
  func.func @transform_6(%arg0: i32, %arg1: i32) -> (i32, i32, i32) {
    %c0_i32 = arith.constant 0 : i32
    %c0_i32_0 = arith.constant 0 : i32
    return %arg0, %arg1, %c0_i32 : i32, i32, i32
  }
}

</mosaic_0001>

<llo_original>
// kernel: tpu_custom_call.1
$region0: #{tpu_custom_call.1}
  #allocation0 [shape = 'u32[]', space=smem, size = 0x4, offset = 0x4, fixed_abs, tag = 'smem constant byte address 0x4 - core index']
  #allocation1 [shape = 'u32[72,128]{1,0:T(1,128)}', space=vmem, size = 0x9000, scoped, tag = 'internal scratch']
  %s0 = inlined_call_operand.vmem [shape: f32[2,1,2,2,9,36], index: 0, kind: input, shape index: {}]
  %s1 = inlined_call_operand.vmem [shape: bf16[2,1,2,2,9,36], index: 1, kind: input, shape index: {}]
  %s2 = inlined_call_operand.vmem [shape: f32[3,3,2,32], index: 2, kind: input, shape index: {}]
  %s3 = inlined_call_operand.vmem [shape: f32[2,32], index: 3, kind: input, shape index: {}]
  %s4 = inlined_call_operand.vmem [shape: f32[2,32], index: 4, kind: input, shape index: {}]
  %s5 = inlined_call_operand.hbm [shape: f32[2,2,8,32], index: 5, kind: output, shape index: {0}]
  %s6 = inlined_call_operand.hbm [shape: f32[2,8,32], index: 6, kind: output, shape index: {1}]
  %7 = xla_tuple %s5, %s6
  %s8 = sld [smem:[#allocation0]]
  $region61: #{tpu_custom_call.1} parent=0
    _
  %s10 = ssub.s32 1, %s8
  %s11 = scalar_select 0, %s10, %s8
  $region1: #{tpu_custom_call.1} parent=0
    #allocation2 [shape = 'u8[16384]{0}', space=vmem, size = 0x4000, scoped, tag = 'output window, operand 0']
    #allocation3 [shape = 's32[2]{0}', space=sflag, size = 0x8, scoped, tag = 'scoped memory for tpu_custom_call.1']
    #allocation4 [shape = 'u8[8192]{0}', space=vmem, size = 0x2000, scoped, tag = 'output window, operand 1']
    #allocation5 [shape = 's32[2]{0}', space=sflag, size = 0x8, scoped, tag = 'scoped memory for tpu_custom_call.1']
    %12 = vsyncpa [#allocation3], 0
    %s13 = scalar_lea.sflag [#allocation3], 1
    %14 = vsyncpa %s13, 0
    %15 = vsyncpa [#allocation5], 0
    %s16 = scalar_lea.sflag [#allocation5], 1
    %17 = vsyncpa %s16, 0
    loop: start=0, step=1, limit=4
    $region2: #{tpu_custom_call.1} parent=1 // loop_pre_header
      _
    $region3: #{tpu_custom_call.1} parent=1 // loop_header
      %s19 = sphi 0, %s23
      %p20 = scmp.ge.s32.totalorder %s19, 4
      %s26 = sphi 0, %s38
      %s27 = sphi 0, %s34
      %s28 = sphi 0, %s26
      %s29 = sphi 0, %s27
      %s30 = sphi 0, %s28
      %s31 = sphi 0, %s29
      %s43 = sphi 0, %s45
      %s46 = sphi 0, %s43
      %s47 = sphi 0, %s46
      %s63 = sphi 0, %s47
      %s71 = sphi 0, %s73
      %s74 = sphi 0, %s71
      %s75 = sphi 0, %s74
      %s91 = sphi 0, %s75
      %s95 = sphi 0, %s95
      %s97 = sphi 0, %s95
      %s98 = sphi 0, %s97
      %s112 = sphi 0, %s98
      %s116 = sphi 0, %s116
      %s118 = sphi 0, %s116
      %s119 = sphi 0, %s118
      %s133 = sphi 0, %s119
      %s137 = sphi 0, %s137
      %s139 = sphi 0, %s137
      %s140 = sphi 0, %s139
      %s154 = sphi 0, %s140
      %s162 = sphi 0, %s164
      %s165 = sphi 0, %s162
      %s166 = sphi 0, %s165
      %s182 = sphi 0, %s166
      %s190 = sphi 0, %s192
      %s193 = sphi 0, %s190
      %s194 = sphi 0, %s193
      %s210 = sphi 0, %s194
    $region4: #{tpu_custom_call.1} parent=1 // loop_header_branch
      %22 = sbr.rel (%p20) target = $region8
    $region5: #{tpu_custom_call.1} parent=1 // loop_body
      %s24 = ssub.s32 %s19, 1
      %s25 = ssub.s32 %s19, 2
      %s32 = sadd.s32 1, %s27
      %p33 = scmp.ge.s32.totalorder %s32, 1
      %s34 = scalar_select %p33, 0, %s32
      %s35 = sadd.s32 1, %s26
      %s36 = scalar_select %p33, %s35, %s26
      %p37 = scmp.ge.s32.totalorder %s36, 2
      %s38 = scalar_select %p37, 0, %s36
      %s39 = ssub.s32 %s26, %s38
      %s40 = ssub.s32 %s27, %s34
      %s41 = sor.u32 %s39, %s40
      %p42 = scmp.eq.s32.totalorder %s41, 0
      %s44 = sadd.s32 %s43, 1
      %s45 = scalar_select %p42, %s43, %s44
      %p48 = pneg %p42
      %p49 = scmp.eq.s32.totalorder %s19, 1
      %p50 = por %p48, %p49
      %p51 = scmp.ne.s32.totalorder %s43, %s46
      %p52 = scmp.eq.s32.totalorder %s19, 0
      %p53 = por %p51, %p52
      %p54 = scmp.ne.s32.totalorder %s43, %s46
      %p55 = scmp.eq.s32.totalorder %s24, 1
      %p56 = por %p54, %p55
      %p57 = scmp.ne.s32.totalorder %s46, %s47
      %p58 = scmp.eq.s32.totalorder %s24, 0
      %p59 = por %p57, %p58
      %p60 = scmp.ne.s32.totalorder %s46, %s47
      %p61 = scmp.eq.s32.totalorder %s25, 1
      %p62 = por %p60, %p61
      %p64 = scmp.ne.s32.totalorder %s47, %s63
      %p65 = scmp.eq.s32.totalorder %s25, 0
      %p66 = por %p64, %p65
      %s67 = ssub.s32 %s26, %s38
      %s68 = ssub.s32 %s27, %s34
      %s69 = sor.u32 %s67, %s68
      %p70 = scmp.eq.s32.totalorder %s69, 0
      %s72 = sadd.s32 %s71, 1
      %s73 = scalar_select %p70, %s71, %s72
      %p76 = pneg %p70
      %p77 = scmp.eq.s32.totalorder %s19, 1
      %p78 = por %p76, %p77
      %p79 = scmp.ne.s32.totalorder %s71, %s74
      %p80 = scmp.eq.s32.totalorder %s19, 0
      %p81 = por %p79, %p80
      %p82 = scmp.ne.s32.totalorder %s71, %s74
      %p83 = scmp.eq.s32.totalorder %s24, 1
      %p84 = por %p82, %p83
      %p85 = scmp.ne.s32.totalorder %s74, %s75
      %p86 = scmp.eq.s32.totalorder %s24, 0
      %p87 = por %p85, %p86
      %p88 = scmp.ne.s32.totalorder %s74, %s75
      %p89 = scmp.eq.s32.totalorder %s25, 1
      %p90 = por %p88, %p89
      %p92 = scmp.ne.s32.totalorder %s75, %s91
      %p93 = scmp.eq.s32.totalorder %s25, 0
      %p94 = por %p92, %p93
      %s96 = sadd.s32 %s95, 1
      %p99 = scmp.eq.s32.totalorder %s19, 1
      %p100 = scmp.ne.s32.totalorder %s95, %s97
      %p101 = scmp.eq.s32.totalorder %s19, 0
      %p102 = por %p100, %p101
      %p103 = scmp.ne.s32.totalorder %s95, %s97
      %p104 = scmp.eq.s32.totalorder %s24, 1
      %p105 = por %p103, %p104
      %p106 = scmp.ne.s32.totalorder %s97, %s98
      %p107 = scmp.eq.s32.totalorder %s24, 0
      %p108 = por %p106, %p107
      %p109 = scmp.ne.s32.totalorder %s97, %s98
      %p110 = scmp.eq.s32.totalorder %s25, 1
      %p111 = por %p109, %p110
      %p113 = scmp.ne.s32.totalorder %s98, %s112
      %p114 = scmp.eq.s32.totalorder %s25, 0
      %p115 = por %p113, %p114
      %s117 = sadd.s32 %s116, 1
      %p120 = scmp.eq.s32.totalorder %s19, 1
      %p121 = scmp.ne.s32.totalorder %s116, %s118
      %p122 = scmp.eq.s32.totalorder %s19, 0
      %p123 = por %p121, %p122
      %p124 = scmp.ne.s32.totalorder %s116, %s118
      %p125 = scmp.eq.s32.totalorder %s24, 1
      %p126 = por %p124, %p125
      %p127 = scmp.ne.s32.totalorder %s118, %s119
      %p128 = scmp.eq.s32.totalorder %s24, 0
      %p129 = por %p127, %p128
      %p130 = scmp.ne.s32.totalorder %s118, %s119
      %p131 = scmp.eq.s32.totalorder %s25, 1
      %p132 = por %p130, %p131
      %p134 = scmp.ne.s32.totalorder %s119, %s133
      %p135 = scmp.eq.s32.totalorder %s25, 0
      %p136 = por %p134, %p135
      %s138 = sadd.s32 %s137, 1
      %p141 = scmp.eq.s32.totalorder %s19, 1
      %p142 = scmp.ne.s32.totalorder %s137, %s139
      %p143 = scmp.eq.s32.totalorder %s19, 0
      %p144 = por %p142, %p143
      %p145 = scmp.ne.s32.totalorder %s137, %s139
      %p146 = scmp.eq.s32.totalorder %s24, 1
      %p147 = por %p145, %p146
      %p148 = scmp.ne.s32.totalorder %s139, %s140
      %p149 = scmp.eq.s32.totalorder %s24, 0
      %p150 = por %p148, %p149
      %p151 = scmp.ne.s32.totalorder %s139, %s140
      %p152 = scmp.eq.s32.totalorder %s25, 1
      %p153 = por %p151, %p152
      %p155 = scmp.ne.s32.totalorder %s140, %s154
      %p156 = scmp.eq.s32.totalorder %s25, 0
      %p157 = por %p155, %p156
      %s158 = ssub.s32 %s26, %s38
      %s159 = ssub.s32 %s27, %s34
      %s160 = sor.u32 %s158, %s159
      %p161 = scmp.eq.s32.totalorder %s160, 0
      %s163 = sadd.s32 %s162, 1
      %s164 = scalar_select %p161, %s162, %s163
      %p167 = pneg %p161
      %p168 = scmp.eq.s32.totalorder %s19, 1
      %p169 = por %p167, %p168
      %p170 = scmp.ne.s32.totalorder %s162, %s165
      %p171 = scmp.eq.s32.totalorder %s19, 0
      %p172 = por %p170, %p171
      %p173 = scmp.ne.s32.totalorder %s162, %s165
      %p174 = scmp.eq.s32.totalorder %s24, 1
      %p175 = por %p173, %p174
      %p176 = scmp.ne.s32.totalorder %s165, %s166
      %p177 = scmp.eq.s32.totalorder %s24, 0
      %p178 = por %p176, %p177
      %p179 = scmp.ne.s32.totalorder %s165, %s166
      %p180 = scmp.eq.s32.totalorder %s25, 1
      %p181 = por %p179, %p180
      %p183 = scmp.ne.s32.totalorder %s166, %s182
      %p184 = scmp.eq.s32.totalorder %s25, 0
      %p185 = por %p183, %p184
      %s186 = ssub.s32 %s26, %s38
      %s187 = ssub.s32 %s27, %s34
      %s188 = sor.u32 %s186, %s187
      %p189 = scmp.eq.s32.totalorder %s188, 0
      %s191 = sadd.s32 %s190, 1
      %s192 = scalar_select %p189, %s190, %s191
      %p195 = pneg %p189
      %p196 = scmp.eq.s32.totalorder %s19, 1
      %p197 = por %p195, %p196
      %p198 = scmp.ne.s32.totalorder %s190, %s193
      %p199 = scmp.eq.s32.totalorder %s19, 0
      %p200 = por %p198, %p199
      %p201 = scmp.ne.s32.totalorder %s190, %s193
      %p202 = scmp.eq.s32.totalorder %s24, 1
      %p203 = por %p201, %p202
      %p204 = scmp.ne.s32.totalorder %s193, %s194
      %p205 = scmp.eq.s32.totalorder %s24, 0
      %p206 = por %p204, %p205
      %p207 = scmp.ne.s32.totalorder %s193, %s194
      %p208 = scmp.eq.s32.totalorder %s25, 1
      %p209 = por %p207, %p208
      %p211 = scmp.ne.s32.totalorder %s194, %s210
      %p212 = scmp.eq.s32.totalorder %s25, 0
      %p213 = por %p211, %p212
      %p214 = scmp.le.s32.totalorder 1, %s19
      %p215 = scmp.lt.s32.totalorder %s19, 3
      %p216 = pnand %p214, %p215
      %p217 = pneg %p216
      // Predicated region
      $region9: #{tpu_custom_call.1} parent=5 // pred_check
        _
      $region10: #{tpu_custom_call.1} parent=5 // pred_check_branch
        %219 = sbr.rel (%p216) target = $region12
      $region11: #{tpu_custom_call.1} parent=5 // pred_region
        %s220 = ssub.s32 %s19, 1
        // Predicated region
        $region13: #{tpu_custom_call.1} parent=11 // pred_check
          %p221 = pneg %p108
        $region14: #{tpu_custom_call.1} parent=11 // pred_check_branch
          %223 = sbr.rel (%p221) target = $region16
        $region15: #{tpu_custom_call.1} parent=11 // pred_region
          _
        $region16: #{tpu_custom_call.1} parent=11 // pred_fallthru
          _
        // Predicated region
        $region17: #{tpu_custom_call.1} parent=11 // pred_check
          %p224 = pneg %p129
        $region18: #{tpu_custom_call.1} parent=11 // pred_check_branch
          %226 = sbr.rel (%p224) target = $region20
        $region19: #{tpu_custom_call.1} parent=11 // pred_region
          _
        $region20: #{tpu_custom_call.1} parent=11 // pred_fallthru
          _
        // Predicated region
        $region21: #{tpu_custom_call.1} parent=11 // pred_check
          %p227 = pneg %p150
        $region22: #{tpu_custom_call.1} parent=11 // pred_check_branch
          %229 = sbr.rel (%p227) target = $region24
        $region23: #{tpu_custom_call.1} parent=11 // pred_region
          _
        $region24: #{tpu_custom_call.1} parent=11 // pred_fallthru
          _
      $region12: #{tpu_custom_call.1} parent=5 // pred_fallthru
        _
      %p230 = scmp.lt.s32.totalorder %s19, 2
      // Predicated region
      $region25: #{tpu_custom_call.1} parent=5 // pred_check
        %p231 = pneg %p230
      $region26: #{tpu_custom_call.1} parent=5 // pred_check_branch
        %233 = sbr.rel (%p231) target = $region28
      $region27: #{tpu_custom_call.1} parent=5 // pred_region
        // Predicated region
        $region29: #{tpu_custom_call.1} parent=27 // pred_check
          %p234 = pneg %p53
        $region30: #{tpu_custom_call.1} parent=27 // pred_check_branch
          %236 = sbr.rel (%p234) target = $region32
        $region31: #{tpu_custom_call.1} parent=27 // pred_region
          %p237 = scmp.lt.s32.totalorder %s26, 1
          %s238 = scalar_select %p237, %s26, 1
          %p239 = scmp.lt.s32.totalorder %s27, 0
          %s240 = scalar_select %p239, %s27, 0
          %s241 = smul.addr %s240, 8
          %s242 = smul.addr %s238, 8
          %s243 = sadd.s32 %s241, %s242
          %s244 = smul.addr %s243, 8
          %s245 = scalar_lea.vmem %s0, %s244
        $region32: #{tpu_custom_call.1} parent=27 // pred_fallthru
          _
        // Predicated region
        $region33: #{tpu_custom_call.1} parent=27 // pred_check
          %p246 = pneg %p81
        $region34: #{tpu_custom_call.1} parent=27 // pred_check_branch
          %248 = sbr.rel (%p246) target = $region36
        $region35: #{tpu_custom_call.1} parent=27 // pred_region
          %p249 = scmp.lt.s32.totalorder %s26, 1
          %s250 = scalar_select %p249, %s26, 1
          %p251 = scmp.lt.s32.totalorder %s27, 0
          %s252 = scalar_select %p251, %s27, 0
          %s253 = smul.addr %s252, 8
          %s254 = smul.addr %s250, 8
          %s255 = sadd.s32 %s253, %s254
          %s256 = smul.addr %s255, 4
          %s257 = scalar_lea.vmem %s1, %s256
        $region36: #{tpu_custom_call.1} parent=27 // pred_fallthru
          _
      $region28: #{tpu_custom_call.1} parent=5 // pred_fallthru
        _
      %p258 = scmp.le.s32.totalorder 1, %s19
      %p259 = scmp.lt.s32.totalorder %s19, 3
      %p260 = pnand %p258, %p259
      %p261 = pneg %p260
      // Predicated region
      $region37: #{tpu_custom_call.1} parent=5 // pred_check
        _
      $region38: #{tpu_custom_call.1} parent=5 // pred_check_branch
        %263 = sbr.rel (%p260) target = $region40
      $region39: #{tpu_custom_call.1} parent=5 // pred_region
        %s264 = ssub.s32 %s19, 1
        %p265 = scmp.lt.s32.totalorder %s28, 1
        %s266 = scalar_select %p265, %s28, 1
        %p267 = scmp.lt.s32.totalorder %s29, 0
        %s268 = scalar_select %p267, %s29, 0
        %s269 = smul.addr %s268, 8
        %s270 = smul.addr %s266, 8
        %s271 = sadd.s32 %s269, %s270
        %s272 = smul.addr %s271, 8
        %s273 = scalar_lea.vmem %s0, %s272
        %p274 = pneg %p59
        %p275 = pneg %p56
        %p276 = scmp.lt.s32.totalorder %s28, 1
        %s277 = scalar_select %p276, %s28, 1
        %p278 = scmp.lt.s32.totalorder %s29, 0
        %s279 = scalar_select %p278, %s29, 0
        %s280 = smul.addr %s279, 8
        %s281 = smul.addr %s277, 8
        %s282 = sadd.s32 %s280, %s281
        %s283 = smul.addr %s282, 4
        %s284 = scalar_lea.vmem %s1, %s283
        %p285 = pneg %p87
        %p286 = pneg %p84
        %p287 = pneg %p108
        %p288 = pneg %p105
        %p289 = pneg %p129
        %p290 = pneg %p126
        %p291 = pneg %p150
        %p292 = pneg %p147
        %p293 = pneg %p178
        %p294 = pneg %p175
        %s295 = sand.u32 %s165, 1
        %s296 = scalar_lea.sflag [#allocation3], %s295
        %s297 = sand.u32 %s165, 1
        %s298 = smul.addr %s297, 16
        %s299 = scalar_lea.vmem [#allocation2], %s298
        %p300 = pneg %p206
        %p301 = pneg %p203
        %s302 = sand.u32 %s193, 1
        %s303 = scalar_lea.sflag [#allocation5], %s302
        %s304 = sand.u32 %s193, 1
        %s305 = smul.addr %s304, 8
        %s306 = scalar_lea.vmem [#allocation4], %s305
        %p307 = scmp.lt.s32.totalorder %s28, 1
        %s308 = scalar_select %p307, %s28, 1
        %p309 = scmp.lt.s32.totalorder %s29, 0
        %s310 = scalar_select %p309, %s29, 0
        %s311 = smul.addr %s310, 8
        %s312 = smul.addr %s308, 8
        %s313 = sadd.s32 %s311, %s312
        %s314 = smul.addr %s313, 8
        %s315 = scalar_lea.vmem %s0, %s314
        %p316 = scmp.lt.s32.totalorder %s28, 1
        %s317 = scalar_select %p316, %s28, 1
        %p318 = scmp.lt.s32.totalorder %s29, 0
        %s319 = scalar_select %p318, %s29, 0
        %s320 = smul.addr %s319, 8
        %s321 = smul.addr %s317, 8
        %s322 = sadd.s32 %s320, %s321
        %s323 = smul.addr %s322, 4
        %s324 = scalar_lea.vmem %s1, %s323
        %v325 = vld [vmem:[%s315] sm:$0xff]
        %v326 = vld [vmem:[%s315 + $0x8] sm:$0x1]
        %v327 = vld [vmem:[%s315 + $0x10] sm:$0xff]
        %v328 = vld [vmem:[%s315 + $0x18] sm:$0x1]
        %v329 = vld [vmem:[%s315 + $0x20] sm:$0xff]
        %v330 = vld [vmem:[%s315 + $0x30] sm:$0xff]
        %v331 = vld [vmem:[%s324] sm:$0xf]
        %v332 = vld [vmem:[%s324 + $0x4] sm:$0x1]
        %v333 = vld [vmem:[%s324 + $0x8] sm:$0xf]
        %v334 = vld [vmem:[%s324 + $0xc] sm:$0x1]
        %v335 = vld [vmem:[%s324 + $0x10] sm:$0xf]
        %v336 = vld [vmem:[%s324 + $0x18] sm:$0xf]
        %v337 = vld [vmem:[%s2] sm:$0x3]
        %v338 = vld [vmem:[%s2 + $0x2] sm:$0x3]
        %v339 = vld [vmem:[%s2 + $0x4] sm:$0x3]
        %v340 = vld [vmem:[%s2 + $0x6] sm:$0x3]
        %v341 = vld [vmem:[%s2 + $0x8] sm:$0x3]
        %v342 = vld [vmem:[%s2 + $0xa] sm:$0x3]
        %v343 = vld [vmem:[%s2 + $0xc] sm:$0x3]
        %v344 = vld [vmem:[%s2 + $0xe] sm:$0x3]
        %v345 = vld [vmem:[%s2 + $0x10] sm:$0x3]
        %v346 = vld [vmem:[%s3] sm:$0x3]
        %v348 = vrot.slane %v346, 1
        %v349 = vld [vmem:[%s4] sm:$0x3]
        %v351 = vrot.slane %v349, 1
        %v352 = vunpack.c.l.bf16 %v331
        %v353 = vadd.f32 %v352, 0.0
        %v354 = vmul.f32 %v325, %v352
        %v356 = vrot.slane %v337, 1
        %v357 = vperm.slane %v337, 0
        %v358 = vperm.slane %v356, 0
        %v361 = vmul.f32 %v354, %v357
        %v362 = vmul.f32 %v354, %v358
        %v363 = vadd.f32 %v361, 0.0
        %v364 = vadd.f32 %v362, 0.0
        %v365 = vunpack.c.l.bf16 %v333
        %v366 = vadd.f32 %v353, %v365
        %v367 = vmul.f32 %v327, %v365
        %v369 = vrot.slane %v338, 1
        %v370 = vperm.slane %v338, 0
        %v371 = vperm.slane %v369, 0
        %v374 = vmul.f32 %v367, %v370
        %v375 = vmul.f32 %v367, %v371
        %v376 = vadd.f32 %v363, %v374
        %v377 = vadd.f32 %v364, %v375
        %379 = vrot.lane.b32.xlu0 %v352, 124
        %v380 = vpop.permute.xlu0 %379
        %v382 = vadd.f32 %v366, %v380
        %v384 = vrot.slane %v339, 1
        %v385 = vperm.slane %v339, 0
        %v386 = vperm.slane %v384, 0
        %387 = vrot.lane.b32.xlu0 %v385, 4
        %v388 = vpop.permute.xlu0 %387
        %389 = vrot.lane.b32.xlu0 %v386, 4
        %v390 = vpop.permute.xlu0 %389
        %v393 = vmul.f32 %v354, %v388
        %v394 = vmul.f32 %v354, %v390
        %397 = vrot.lane.b32.xlu0 %v393, 124
        %v398 = vpop.permute.xlu0 %397
        %399 = vrot.lane.b32.xlu0 %v394, 124
        %v400 = vpop.permute.xlu0 %399
        %v403 = vadd.f32 %v376, %v398
        %v404 = vadd.f32 %v377, %v400
        %v405 = vunpack.c.l.bf16 %v335
        %v406 = vadd.f32 %v382, %v405
        %v407 = vmul.f32 %v329, %v405
        %v409 = vrot.slane %v340, 1
        %v410 = vperm.slane %v340, 0
        %v411 = vperm.slane %v409, 0
        %v414 = vmul.f32 %v407, %v410
        %v415 = vmul.f32 %v407, %v411
        %v416 = vadd.f32 %v403, %v414
        %v417 = vadd.f32 %v404, %v415
        %v418 = vunpack.c.l.bf16 %v336
        %v419 = vadd.f32 %v406, %v418
        %v420 = vmul.f32 %v330, %v418
        %v422 = vrot.slane %v341, 1
        %v423 = vperm.slane %v341, 0
        %v424 = vperm.slane %v422, 0
        %v427 = vmul.f32 %v420, %v423
        %v428 = vmul.f32 %v420, %v424
        %v429 = vadd.f32 %v416, %v427
        %v430 = vadd.f32 %v417, %v428
        %432 = vrot.lane.b32.xlu0 %v405, 124
        %v433 = vpop.permute.xlu0 %432
        %v435 = vadd.f32 %v419, %v433
        %v437 = vrot.slane %v342, 1
        %v438 = vperm.slane %v342, 0
        %v439 = vperm.slane %v437, 0
        %440 = vrot.lane.b32.xlu0 %v438, 4
        %v441 = vpop.permute.xlu0 %440
        %442 = vrot.lane.b32.xlu0 %v439, 4
        %v443 = vpop.permute.xlu0 %442
        %v446 = vmul.f32 %v407, %v441
        %v447 = vmul.f32 %v407, %v443
        %450 = vrot.lane.b32.xlu0 %v446, 124
        %v451 = vpop.permute.xlu0 %450
        %452 = vrot.lane.b32.xlu0 %v447, 124
        %v453 = vpop.permute.xlu0 %452
        %v456 = vadd.f32 %v429, %v451
        %v457 = vadd.f32 %v430, %v453
        %v458 = vunpack.c.l.bf16 %v332
        %vm460 = vcmask 1046528
        %v461 = vrot.slane %v352, 1
        %v462 = vrot.slane %v458, 1
        %v463 = vsel %vm460, %v461, %v462
        %v465 = vadd.f32 %v435, %v463
        %v466 = vmul.f32 %v326, %v458
        %v468 = vrot.slane %v343, 1
        %v469 = vperm.slane %v343, 0
        %v470 = vperm.slane %v468, 0
        %v473 = vmul.f32 %v354, %v469
        %v474 = vmul.f32 %v466, %v469
        %v475 = vmul.f32 %v354, %v470
        %v476 = vmul.f32 %v466, %v470
        %v481 = vrot.slane %v473, 1
        %v482 = vrot.slane %v474, 1
        %v483 = vsel %vm460, %v481, %v482
        %v484 = vrot.slane %v475, 1
        %v485 = vrot.slane %v476, 1
        %v486 = vsel %vm460, %v484, %v485
        %v489 = vadd.f32 %v456, %v483
        %v490 = vadd.f32 %v457, %v486
        %v491 = vunpack.c.l.bf16 %v334
        %v494 = vrot.slane %v365, 1
        %v495 = vrot.slane %v491, 1
        %v496 = vsel %vm460, %v494, %v495
        %v498 = vadd.f32 %v465, %v496
        %v499 = vmul.f32 %v328, %v491
        %v501 = vrot.slane %v344, 1
        %v502 = vperm.slane %v344, 0
        %v503 = vperm.slane %v501, 0
        %v506 = vmul.f32 %v367, %v502
        %v507 = vmul.f32 %v499, %v502
        %v508 = vmul.f32 %v367, %v503
        %v509 = vmul.f32 %v499, %v503
        %v514 = vrot.slane %v506, 1
        %v515 = vrot.slane %v507, 1
        %v516 = vsel %vm460, %v514, %v515
        %v517 = vrot.slane %v508, 1
        %v518 = vrot.slane %v509, 1
        %v519 = vsel %vm460, %v517, %v518
        %v522 = vadd.f32 %v489, %v516
        %v523 = vadd.f32 %v490, %v519
        %524 = vrot.lane.b32.xlu0 %v463, 124
        %v525 = vpop.permute.xlu0 %524
        %v527 = vadd.f32 %v498, %v525
        %v529 = vrot.slane %v345, 1
        %v530 = vperm.slane %v345, 0
        %v531 = vperm.slane %v529, 0
        %532 = vrot.lane.b32.xlu0 %v530, 4
        %v533 = vpop.permute.xlu0 %532
        %534 = vrot.lane.b32.xlu0 %v531, 4
        %v535 = vpop.permute.xlu0 %534
        %v538 = vmul.f32 %v354, %v533
        %v539 = vmul.f32 %v466, %v533
        %v540 = vmul.f32 %v354, %v535
        %v541 = vmul.f32 %v466, %v535
        %v546 = vrot.slane %v538, 1
        %v547 = vrot.slane %v539, 1
        %v548 = vsel %vm460, %v546, %v547
        %v549 = vrot.slane %v540, 1
        %v550 = vrot.slane %v541, 1
        %v551 = vsel %vm460, %v549, %v550
        %552 = vrot.lane.b32.xlu0 %v548, 124
        %v553 = vpop.permute.xlu0 %552
        %554 = vrot.lane.b32.xlu0 %v551, 124
        %v555 = vpop.permute.xlu0 %554
        %v558 = vadd.f32 %v522, %v553
        %v559 = vadd.f32 %v523, %v555
        %v560 = vmax.f32 %v527, 0.0
        %v561 = vmin.f32 %v560, 1.0
        %v562 = vadd.f32 %v527, 1e-08
        %v563 = vrcp.pop %v562
        %v564 = vmul.f32 %v562, %v563
        %v565 = vsub.f32 1.0, %v564
        %v566 = vmul.f32 %v563, %v565
        %v567 = vadd.f32 %v563, %v566
        %vm568 = vweird.f32 %v562
        %vm569 = vweird.f32 %v563
        %vm570 = vmor %vm568, %vm569
        %v571 = vsel %vm570, %v563, %v567
        %v572 = vand.u32 2147483647, %v562
        %vm573 = vcmp.eq.f32.partialorder %v572, 8.507059e+37
        %v574 = vand.u32 %v562, 2147483648
        %v575 = vor.u32 1.1754944e-38, %v574
        %v576 = vsel %vm573, %v575, %v571
        %v577 = vmul.f32 9.0, %v576
        %v578 = vmul.f32 %v577, %v561
        %v579 = vmul.f32 %v558, %v578
        %v580 = vmul.f32 %v559, %v578
        %v581 = vperm.slane %v346, 0
        %v582 = vperm.slane %v348, 0
        %v585 = vmul.f32 %v579, %v581
        %v586 = vmul.f32 %v580, %v582
        %v587 = vperm.slane %v349, 0
        %v588 = vperm.slane %v351, 0
        %v591 = vadd.f32 %v585, %v587
        %v592 = vadd.f32 %v586, %v588
        %v593 = vmax.f32 %v591, 0.0
        %v594 = vmax.f32 %v592, 0.0
        %vm595 = vcmask 261120
        %596 = vst.msk [vmem:[%s299] sm:$0xff] %vm595, %v593
        %597 = vst.msk [vmem:[%s299 + $0x8] sm:$0xff] %vm595, %v594
        %598 = vst.msk [vmem:[%s306] sm:$0xff] %vm595, %v561
        %s599 = sand.u32 %s165, 1
        %s600 = scalar_lea.sflag [#allocation3], %s599
        %s601 = sand.u32 %s165, 1
        %s602 = smul.addr %s601, 16
        %s603 = scalar_lea.vmem [#allocation2], %s602
        %s604 = sand.u32 %s193, 1
        %s605 = scalar_lea.sflag [#allocation5], %s604
        %s606 = sand.u32 %s193, 1
        %s607 = smul.addr %s606, 8
        %s608 = scalar_lea.vmem [#allocation4], %s607
        // Predicated region
        $region41: #{tpu_custom_call.1} parent=39 // pred_check
          %p609 = pneg %p175
        $region42: #{tpu_custom_call.1} parent=39 // pred_check_branch
          %611 = sbr.rel (%p609) target = $region44
        $region43: #{tpu_custom_call.1} parent=39 // pred_region
          %613 = vsyncadd %s600, 0
          %s614 = smul.addr %s28, 2
          %s615 = sadd.s32 %s29, %s614
          %s616 = smul.addr %s615, 8
          %s617 = scalar_lea.hbm %s5, %s616
          %s618 = sshll.u32 %s603, 4
          %s619 = int_to_ptr.vmem [resolvable:$true] %s618
          %s620 = sshll.u32 %s617, 4
          %s621 = int_to_ptr.hbm [resolvable:$true] %s620
          %626 = dma.vmem_to_hbm [thread:$0]  %s619, 256, %s621, %s600, 128, 128, 8
        $region44: #{tpu_custom_call.1} parent=39 // pred_fallthru
          _
        // Predicated region
        $region45: #{tpu_custom_call.1} parent=39 // pred_check
          %p627 = pneg %p203
        $region46: #{tpu_custom_call.1} parent=39 // pred_check_branch
          %629 = sbr.rel (%p627) target = $region48
        $region47: #{tpu_custom_call.1} parent=39 // pred_region
          %631 = vsyncadd %s605, 0
          %s632 = sadd.s32 %s29, %s28
          %s633 = smul.addr %s632, 8
          %s634 = scalar_lea.hbm %s6, %s633
          %s636 = sshll.u32 %s608, 4
          %s637 = int_to_ptr.vmem [resolvable:$true] %s636
          %s638 = sshll.u32 %s634, 4
          %s639 = int_to_ptr.hbm [resolvable:$true] %s638
          %641 = dma.vmem_to_hbm [thread:$0]  %s637, 128, %s639, %s605
        $region48: #{tpu_custom_call.1} parent=39 // pred_fallthru
          _
      $region40: #{tpu_custom_call.1} parent=5 // pred_fallthru
        _
      %p642 = scmp.le.s32.totalorder 2, %s19
      // Predicated region
      $region49: #{tpu_custom_call.1} parent=5 // pred_check
        %p643 = pneg %p642
      $region50: #{tpu_custom_call.1} parent=5 // pred_check_branch
        %645 = sbr.rel (%p643) target = $region52
      $region51: #{tpu_custom_call.1} parent=5 // pred_region
        %s646 = ssub.s32 %s19, 2
        // Predicated region
        $region53: #{tpu_custom_call.1} parent=51 // pred_check
          %p647 = pneg %p181
        $region54: #{tpu_custom_call.1} parent=51 // pred_check_branch
          %649 = sbr.rel (%p647) target = $region56
        $region55: #{tpu_custom_call.1} parent=51 // pred_region
          %s650 = sand.u32 %s166, 1
          %s651 = scalar_lea.sflag [#allocation3], %s650
          %s652 = sand.u32 %s166, 1
          %s653 = smul.addr %s652, 16
          %s654 = scalar_lea.vmem [#allocation2], %s653
          %656 = dma.done %s651, 256
        $region56: #{tpu_custom_call.1} parent=51 // pred_fallthru
          _
        // Predicated region
        $region57: #{tpu_custom_call.1} parent=51 // pred_check
          %p657 = pneg %p209
        $region58: #{tpu_custom_call.1} parent=51 // pred_check_branch
          %659 = sbr.rel (%p657) target = $region60
        $region59: #{tpu_custom_call.1} parent=51 // pred_region
          %s660 = sand.u32 %s194, 1
          %s661 = scalar_lea.sflag [#allocation5], %s660
          %s662 = sand.u32 %s194, 1
          %s663 = smul.addr %s662, 8
          %s664 = scalar_lea.vmem [#allocation4], %s663
          %666 = dma.done %s661, 128
        $region60: #{tpu_custom_call.1} parent=51 // pred_fallthru
          _
      $region52: #{tpu_custom_call.1} parent=5 // pred_fallthru
        _
    $region6: #{tpu_custom_call.1} parent=1 // loop_footer
      %s23 = sadd.s32 1, %s19
    $region7: #{tpu_custom_call.1} parent=1 // loop_footer_branch
      %18 = sbr.rel target = $region3
    $region8: #{tpu_custom_call.1} parent=1 // loop_exit
      _
    %667 = vsyncpa [#allocation3], 1
    %s668 = scalar_lea.sflag [#allocation3], 1
    %669 = vsyncpa %s668, 1
    %670 = vsyncpa [#allocation5], 1
    %s671 = scalar_lea.sflag [#allocation5], 1
    %672 = vsyncpa %s671, 1

</llo_original>
